<compile_context>
chip_gen: v5e
topology: v5e:2x2
jax: 0.10.0
libtpu: 0.0.40
codegen_flags: <defaults>
</compile_context>

<pallas_src>
import jax
import jax.numpy as jnp
from jax.experimental import pallas as pl
from jax.experimental.pallas import tpu as pltpu


# ----------------------------- model dims (small) -----------------------------
BATCH = 2
SEQ = 8
EMBED_DIM = 32
HEADS = 4
D_K = EMBED_DIM // HEADS
D_FF = 64
VOCAB = 50
MAX_SEQ_LEN = 16
NUM_CLS = 4
LN_EPS = 1e-5

NTOK = BATCH * SEQ              # 16 flat tokens
STACK = HEADS * NTOK            # 64 head-stacked rows
LANE = 128                      # lane-dense padded width
OUT_ROWS = 8                    # padded output sublanes (full (8,128) store)
NEG_BIG = -1e30                 # additive mask / padded-bias value

# --------------------- packed parameter slab row layout -----------------------
R_EMB = 0                       # 50 rows, lanes 0:32   embedding table
R_POS = 56                      # 16 rows, lanes 0:32   positional (tiled over batch)
R_QKV = 72                      # 32 rows, lanes 0:96   [Wq | Wk | Wv]
R_WO = 104                      # 32 rows, lanes 0:32   W_o
R_FF1 = 136                     # 32 rows, lanes 0:64   W_ff1
R_FF2 = 168                     # 64 rows, lanes 0:32   W_ff2
R_CLS = 232                     # 32 rows, lanes 0:128  classifier (zero-padded cols)
R_VEC = 264                     # 8 rows,  lanes 0:128  LN affine + biases
R_BIAS = 272                    # 64 rows, lanes 0:64   head/batch block-diag mask bias
R_POOL = 336                    # 8 rows,  lanes 0:16   mean-pool matrix
P_ROWS = 344


# ------------------------------- Pallas kernel --------------------------------
def transformer_kernel(tok_ref, p_ref, out_ref):
    f32 = jnp.float32
    D = EMBED_DIM

    # ---- parameter views: static slices of the single packed VMEM slab ----
    emb = p_ref[R_EMB:R_EMB + VOCAB, 0:D]                  # (50, 32)
    pos = p_ref[R_POS:R_POS + NTOK, 0:D]                   # (16, 32)
    wqkv = p_ref[R_QKV:R_QKV + D, 0:3 * D]                 # (32, 96)
    wo = p_ref[R_WO:R_WO + D, 0:D]                         # (32, 32)
    wff1 = p_ref[R_FF1:R_FF1 + D, 0:D_FF]                  # (32, 64)
    wff2 = p_ref[R_FF2:R_FF2 + D_FF, 0:D]                  # (64, 32)
    wcls = p_ref[R_CLS:R_CLS + D, :]                       # (32, 128)
    ln1_g = p_ref[R_VEC + 0:R_VEC + 1, 0:D]
    ln1_b = p_ref[R_VEC + 1:R_VEC + 2, 0:D]
    ln2_g = p_ref[R_VEC + 2:R_VEC + 3, 0:D]
    ln2_b = p_ref[R_VEC + 3:R_VEC + 4, 0:D]
    b_ff1 = p_ref[R_VEC + 4:R_VEC + 5, 0:D_FF]
    b_ff2 = p_ref[R_VEC + 5:R_VEC + 6, 0:D]
    b_cls = p_ref[R_VEC + 6:R_VEC + 7, :]                  # (1, 128), pad cols = -1e30
    attn_bias = p_ref[R_BIAS:R_BIAS + STACK, 0:STACK]      # (64, 64)
    pool = p_ref[R_POOL:R_POOL + OUT_ROWS, 0:NTOK]         # (8, 16)

    # ---- fused embedding lookup: one-hot(token) @ table (MXU) + positional ----
    tid = tok_ref[...]                                     # (16, 1) int32
    vocab_iota = jax.lax.broadcasted_iota(jnp.int32, (NTOK, VOCAB), 1)
    onehot = (vocab_iota == tid).astype(f32)               # (16, 50)
    x = jnp.dot(onehot, emb, preferred_element_type=f32) + pos        # (16, 32)

    # ---- fused QKV projection: one 2-D matmul, [Q|K|V] at lane 0/32/64 ----
    qkv = jnp.dot(x, wqkv, preferred_element_type=f32)                # (16, 96)

    # head-stack along sublanes: row h*NTOK + n  ->  (64, 8)
    qs = jnp.concatenate(
        [qkv[:, h * D_K:(h + 1) * D_K] for h in range(HEADS)], axis=0)
    ks = jnp.concatenate(
        [qkv[:, D + h * D_K:D + (h + 1) * D_K] for h in range(HEADS)], axis=0)
    vs = jnp.concatenate(
        [qkv[:, 2 * D + h * D_K:2 * D + (h + 1) * D_K] for h in range(HEADS)], axis=0)

    # ---- attention: one score matmul + one softmax + one ctx matmul ----
    scale = 1.0 / (D_K ** 0.5)
    scores = jnp.einsum('qd,kd->qk', qs, ks,
                        preferred_element_type=f32) * scale           # (64, 64)
    scores = scores + attn_bias            # -1e30 off own (head, batch) block
    scores = scores - jnp.max(scores, axis=-1, keepdims=True)
    p = jnp.exp(scores)
    p = p / jnp.sum(p, axis=-1, keepdims=True)            # exact division
    ctx_s = jnp.dot(p, vs, preferred_element_type=f32)                # (64, 8)

    # un-stack heads back onto lanes: (16, 32) with columns h*D_K + d
    ctx = jnp.concatenate(
        [ctx_s[h * NTOK:(h + 1) * NTOK, :] for h in range(HEADS)], axis=1)

    # fused per-head output projection == one 2-D matmul
    attn = jnp.dot(ctx, wo, preferred_element_type=f32)               # (16, 32)

    # ---- residual + LayerNorm 1 ----
    h1 = attn + x
    mu = jnp.mean(h1, axis=-1, keepdims=True)
    var = jnp.mean((h1 - mu) ** 2, axis=-1, keepdims=True)
    h1 = (h1 - mu) * jax.lax.rsqrt(var + LN_EPS) * ln1_g + ln1_b

    # ---- feed-forward ----
    ff = jnp.dot(h1, wff1, preferred_element_type=f32) + b_ff1
    ff = jnp.maximum(ff, 0.0)
    ff = jnp.dot(ff, wff2, preferred_element_type=f32) + b_ff2

    # ---- residual + LayerNorm 2 ----
    h2 = ff + h1
    mu2 = jnp.mean(h2, axis=-1, keepdims=True)
    var2 = jnp.mean((h2 - mu2) ** 2, axis=-1, keepdims=True)
    h2 = (h2 - mu2) * jax.lax.rsqrt(var2 + LN_EPS) * ln2_g + ln2_b

    # ---- mean pool per batch element (precomputed pooling matmul) ----
    pooled = jnp.dot(pool, h2, preferred_element_type=f32)            # (8, 32)

    # ---- classifier + log_softmax (lane-dense; padded bias = -1e30) ----
    logits = jnp.dot(pooled, wcls, preferred_element_type=f32) + b_cls  # (8, 128)
    m = jnp.max(logits, axis=-1, keepdims=True)
    z = logits - m
    out_ref[...] = z - jnp.log(jnp.sum(jnp.exp(z), axis=-1, keepdims=True))


# ------------------- one-time host-side parameter packing ----------------------
def pack_inputs(params):
    """Build the single packed (P_ROWS, 128) f32 parameter slab. Run ONCE."""
    f32 = jnp.float32
    D = EMBED_DIM
    buf = jnp.zeros((P_ROWS, LANE), f32)

    buf = buf.at[R_EMB:R_EMB + VOCAB, :D].set(params["embedding"])
    pos_tiled = jnp.tile(params["pos_embedding"][:SEQ], (BATCH, 1))       # (16, 32)
    buf = buf.at[R_POS:R_POS + NTOK, :D].set(pos_tiled)

    wqkv = jnp.concatenate([params["w_q"], params["w_k"], params["w_v"]], axis=1)
    buf = buf.at[R_QKV:R_QKV + D, :3 * D].set(wqkv)
    buf = buf.at[R_WO:R_WO + D, :D].set(params["w_o"])
    buf = buf.at[R_FF1:R_FF1 + D, :D_FF].set(params["w_ff1"])
    buf = buf.at[R_FF2:R_FF2 + D_FF, :D].set(params["w_ff2"])
    buf = buf.at[R_CLS:R_CLS + D, :NUM_CLS].set(params["w_cls"])

    buf = buf.at[R_VEC + 0, :D].set(params["ln1_g"][0])
    buf = buf.at[R_VEC + 1, :D].set(params["ln1_b"][0])
    buf = buf.at[R_VEC + 2, :D].set(params["ln2_g"][0])
    buf = buf.at[R_VEC + 3, :D].set(params["ln2_b"][0])
    buf = buf.at[R_VEC + 4, :D_FF].set(params["b_ff1"][0])
    buf = buf.at[R_VEC + 5, :D].set(params["b_ff2"][0])
    buf = buf.at[R_VEC + 6, :].set(
        jnp.full((LANE,), NEG_BIG, f32).at[:NUM_CLS].set(params["b_cls"][0]))

    # attention mask bias over head-stacked rows (row = h*NTOK + b*SEQ + s):
    # attend only within the same head AND the same batch element.
    ridx = jnp.arange(STACK)
    head_of = ridx // NTOK
    bat_of = (ridx % NTOK) // SEQ
    same = (head_of[:, None] == head_of[None, :]) & (bat_of[:, None] == bat_of[None, :])
    bias = jnp.where(same, 0.0, NEG_BIG).astype(f32)                      # (64, 64)
    buf = buf.at[R_BIAS:R_BIAS + STACK, :STACK].set(bias)

    # mean-pool matrix: rows >= BATCH stay zero (padded output rows)
    prow = jnp.arange(OUT_ROWS)[:, None]
    pcol = jnp.arange(NTOK)[None, :] // SEQ
    pool = jnp.where(prow == pcol, 1.0 / SEQ, 0.0).astype(f32)            # (8, 16)
    buf = buf.at[R_POOL:R_POOL + OUT_ROWS, :NTOK].set(pool)
    return buf


# ------------------------------- hot-path wrapper -------------------------------
@jax.jit
def transformer_forward(token_ids, packed_params):
    tok2d = token_ids.reshape(NTOK, 1).astype(jnp.int32)
    vmem = pl.BlockSpec(memory_space=pltpu.MemorySpace.VMEM)
    out = pl.pallas_call(
        transformer_kernel,
        out_shape=jax.ShapeDtypeStruct((OUT_ROWS, LANE), jnp.float32),
        in_specs=[vmem, vmem],
        out_specs=vmem,
    )(tok2d, packed_params)
    return out[:BATCH, :NUM_CLS]                                          # (B, NUM_CLS)


# ------------------------------ reference (pure JAX) ----------------------------
def reference_forward(token_ids, params):
    B, S = token_ids.shape
    tok = params["embedding"][token_ids]
    pos = params["pos_embedding"][:S]
    x = tok + pos[None, :, :]

    q = x @ params["w_q"]
    k = x @ params["w_k"]
    v = x @ params["w_v"]
    split = lambda t: t.reshape(B, S, HEADS, D_K).transpose(0, 2, 1, 3)
    qh, kh, vh = split(q), split(k), split(v)
    sc = (qh @ kh.transpose(0, 1, 3, 2)) / jnp.sqrt(jnp.float32(D_K))
    p = jax.nn.softmax(sc, axis=-1)
    ctx = (p @ vh).transpose(0, 2, 1, 3).reshape(B, S, EMBED_DIM)
    attn = ctx @ params["w_o"]

    def ln(y, g, b):
        mu = y.mean(-1, keepdims=True)
        var = ((y - mu) ** 2).mean(-1, keepdims=True)
        return (y - mu) * jax.lax.rsqrt(var + LN_EPS) * g + b

    h1 = ln(attn + x, params["ln1_g"][0], params["ln1_b"][0])
    ff = jnp.maximum(h1 @ params["w_ff1"] + params["b_ff1"][0], 0.0)
    ff = ff @ params["w_ff2"] + params["b_ff2"][0]
    h2 = ln(ff + h1, params["ln2_g"][0], params["ln2_b"][0])
    pooled = h2.mean(axis=1)
    logits = pooled @ params["w_cls"] + params["b_cls"][0]
    return jax.nn.log_softmax(logits, axis=-1)


# ------------------------------ param init -------------------------------------
def init_params(key):
    ks = jax.random.split(key, 12)
    f32 = jnp.float32
    return {
        "embedding":     jax.random.normal(ks[0], (VOCAB, EMBED_DIM), f32) * 0.02,
        "pos_embedding": jax.random.normal(ks[1], (MAX_SEQ_LEN, EMBED_DIM), f32) * 0.02,
        "w_q": jax.random.normal(ks[2], (EMBED_DIM, EMBED_DIM), f32) * 0.1,
        "w_k": jax.random.normal(ks[3], (EMBED_DIM, EMBED_DIM), f32) * 0.1,
        "w_v": jax.random.normal(ks[4], (EMBED_DIM, EMBED_DIM), f32) * 0.1,
        "w_o": jax.random.normal(ks[5], (EMBED_DIM, EMBED_DIM), f32) * 0.1,
        "ln1_g": jnp.ones((1, EMBED_DIM), f32),
        "ln1_b": jnp.zeros((1, EMBED_DIM), f32),
        "ln2_g": jnp.ones((1, EMBED_DIM), f32),
        "ln2_b": jnp.zeros((1, EMBED_DIM), f32),
        "w_ff1": jax.random.normal(ks[6], (EMBED_DIM, D_FF), f32) * 0.1,
        "b_ff1": jax.random.normal(ks[7], (1, D_FF), f32) * 0.01,
        "w_ff2": jax.random.normal(ks[8], (D_FF, EMBED_DIM), f32) * 0.1,
        "b_ff2": jax.random.normal(ks[9], (1, EMBED_DIM), f32) * 0.01,
        "w_cls": jax.random.normal(ks[10], (EMBED_DIM, NUM_CLS), f32) * 0.1,
        "b_cls": jax.random.normal(ks[11], (1, NUM_CLS), f32) * 0.01,
    }


# --------------------------------- main -----------------------------------------
if __name__ == "__main__":
    key = jax.random.PRNGKey(0)
    k_tok, k_par = jax.random.split(key)

    token_ids = jax.random.randint(k_tok, (BATCH, SEQ), 0, VOCAB, dtype=jnp.int32)
    params = init_params(k_par)

    # one-time packing, hoisted out of the per-call hot path
    packed = jax.block_until_ready(pack_inputs(params))

    logp = transformer_forward(token_ids, packed)
    jax.block_until_ready(logp)

    assert logp.shape == (BATCH, NUM_CLS)
    # log_softmax rows should exponentiate-sum to 1
    assert bool(jnp.all(jnp.abs(jnp.sum(jnp.exp(logp), axis=-1) - 1.0) < 1e-4))

    # match the pure-JAX reference (MXU f32-via-bf16 passes -> small tolerance)
    ref = reference_forward(token_ids, params)
    err = float(jnp.max(jnp.abs(logp - ref)))
    assert err < 2e-2, f"max abs err {err}"

    print("KERNEL_OK")
</pallas_src>

<mosaic_0001>
module attributes {stable_mosaic.version = 11 : i64} {
  func.func @transformer_kernel(%arg0: memref<16x1xi32, #tpu.memory_space<vmem>>, %arg1: memref<344x128xf32, #tpu.memory_space<vmem>>, %arg2: memref<8x128xf32, #tpu.memory_space<vmem>>) attributes {dimension_semantics = [], scalar_prefetch = 0 : i64, scratch_operands = 0 : i64, tpu.core_type = #tpu.core_type<tc>} {
    %c0 = arith.constant 0 : index
    %c0_0 = arith.constant 0 : index
    %0 = vector.load %arg1[%c0, %c0_0] : memref<344x128xf32, #tpu.memory_space<vmem>>, vector<50x32xf32>
    %c56 = arith.constant 56 : index
    %c0_1 = arith.constant 0 : index
    %1 = vector.load %arg1[%c56, %c0_1] : memref<344x128xf32, #tpu.memory_space<vmem>>, vector<16x32xf32>
    %c72 = arith.constant 72 : index
    %c0_2 = arith.constant 0 : index
    %2 = vector.load %arg1[%c72, %c0_2] : memref<344x128xf32, #tpu.memory_space<vmem>>, vector<32x96xf32>
    %c104 = arith.constant 104 : index
    %c0_3 = arith.constant 0 : index
    %3 = vector.load %arg1[%c104, %c0_3] : memref<344x128xf32, #tpu.memory_space<vmem>>, vector<32x32xf32>
    %c136 = arith.constant 136 : index
    %c0_4 = arith.constant 0 : index
    %4 = vector.load %arg1[%c136, %c0_4] : memref<344x128xf32, #tpu.memory_space<vmem>>, vector<32x64xf32>
    %c168 = arith.constant 168 : index
    %c0_5 = arith.constant 0 : index
    %5 = vector.load %arg1[%c168, %c0_5] : memref<344x128xf32, #tpu.memory_space<vmem>>, vector<64x32xf32>
    %c232 = arith.constant 232 : index
    %c0_6 = arith.constant 0 : index
    %6 = vector.load %arg1[%c232, %c0_6] : memref<344x128xf32, #tpu.memory_space<vmem>>, vector<32x128xf32>
    %c264 = arith.constant 264 : index
    %c0_7 = arith.constant 0 : index
    %7 = vector.load %arg1[%c264, %c0_7] : memref<344x128xf32, #tpu.memory_space<vmem>>, vector<1x32xf32>
    %c265 = arith.constant 265 : index
    %c0_8 = arith.constant 0 : index
    %8 = vector.load %arg1[%c265, %c0_8] : memref<344x128xf32, #tpu.memory_space<vmem>>, vector<1x32xf32>
    %c266 = arith.constant 266 : index
    %c0_9 = arith.constant 0 : index
    %9 = vector.load %arg1[%c266, %c0_9] : memref<344x128xf32, #tpu.memory_space<vmem>>, vector<1x32xf32>
    %c267 = arith.constant 267 : index
    %c0_10 = arith.constant 0 : index
    %10 = vector.load %arg1[%c267, %c0_10] : memref<344x128xf32, #tpu.memory_space<vmem>>, vector<1x32xf32>
    %c268 = arith.constant 268 : index
    %c0_11 = arith.constant 0 : index
    %11 = vector.load %arg1[%c268, %c0_11] : memref<344x128xf32, #tpu.memory_space<vmem>>, vector<1x64xf32>
    %c269 = arith.constant 269 : index
    %c0_12 = arith.constant 0 : index
    %12 = vector.load %arg1[%c269, %c0_12] : memref<344x128xf32, #tpu.memory_space<vmem>>, vector<1x32xf32>
    %c270 = arith.constant 270 : index
    %c0_13 = arith.constant 0 : index
    %13 = vector.load %arg1[%c270, %c0_13] : memref<344x128xf32, #tpu.memory_space<vmem>>, vector<1x128xf32>
    %c272 = arith.constant 272 : index
    %c0_14 = arith.constant 0 : index
    %14 = vector.load %arg1[%c272, %c0_14] : memref<344x128xf32, #tpu.memory_space<vmem>>, vector<64x64xf32>
    %c336 = arith.constant 336 : index
    %c0_15 = arith.constant 0 : index
    %15 = vector.load %arg1[%c336, %c0_15] : memref<344x128xf32, #tpu.memory_space<vmem>>, vector<8x16xf32>
    %c0_16 = arith.constant 0 : index
    %c0_17 = arith.constant 0 : index
    %16 = vector.load %arg0[%c0_16, %c0_17] : memref<16x1xi32, #tpu.memory_space<vmem>>, vector<16x1xi32>
    %17 = tpu.iota {dimensions = array<i32: 1>} : vector<16x50xi32>
    %18 = vector.broadcast %16 : vector<16x1xi32> to vector<16x50xi32>
    %19 = arith.cmpi eq, %17, %18 : vector<16x50xi32>
    %20 = arith.extui %19 : vector<16x50xi1> to vector<16x50xi32>
    %21 = arith.sitofp %20 : vector<16x50xi32> to vector<16x50xf32>
    %cst = arith.constant dense<0.000000e+00> : vector<16x32xf32>
    %22 = tpu.matmul %21, %0, %cst {dimension_numbers = #tpu.dot_dimension_numbers<[1], [0], [0], [1], [0, 0, 1, 1], [], []>} : vector<16x50xf32>, vector<50x32xf32>, vector<16x32xf32> -> vector<16x32xf32>
    %23 = arith.addf %22, %1 : vector<16x32xf32>
    %cst_18 = arith.constant dense<0.000000e+00> : vector<16x96xf32>
    %24 = tpu.matmul %23, %2, %cst_18 {dimension_numbers = #tpu.dot_dimension_numbers<[1], [0], [0], [1], [0, 0, 1, 1], [], []>} : vector<16x32xf32>, vector<32x96xf32>, vector<16x96xf32> -> vector<16x96xf32>
    %25 = vector.extract_strided_slice %24 {offsets = [0, 0], sizes = [16, 8], strides = [1, 1]} : vector<16x96xf32> to vector<16x8xf32>
    %26 = vector.extract_strided_slice %24 {offsets = [0, 8], sizes = [16, 8], strides = [1, 1]} : vector<16x96xf32> to vector<16x8xf32>
    %27 = vector.extract_strided_slice %24 {offsets = [0, 16], sizes = [16, 8], strides = [1, 1]} : vector<16x96xf32> to vector<16x8xf32>
    %28 = vector.extract_strided_slice %24 {offsets = [0, 24], sizes = [16, 8], strides = [1, 1]} : vector<16x96xf32> to vector<16x8xf32>
    %29 = tpu.concatenate %25, %26, %27, %28 in 0 : vector<16x8xf32>, vector<16x8xf32>, vector<16x8xf32>, vector<16x8xf32> -> vector<64x8xf32>
    %30 = vector.extract_strided_slice %24 {offsets = [0, 32], sizes = [16, 8], strides = [1, 1]} : vector<16x96xf32> to vector<16x8xf32>
    %31 = vector.extract_strided_slice %24 {offsets = [0, 40], sizes = [16, 8], strides = [1, 1]} : vector<16x96xf32> to vector<16x8xf32>
    %32 = vector.extract_strided_slice %24 {offsets = [0, 48], sizes = [16, 8], strides = [1, 1]} : vector<16x96xf32> to vector<16x8xf32>
    %33 = vector.extract_strided_slice %24 {offsets = [0, 56], sizes = [16, 8], strides = [1, 1]} : vector<16x96xf32> to vector<16x8xf32>
    %34 = tpu.concatenate %30, %31, %32, %33 in 0 : vector<16x8xf32>, vector<16x8xf32>, vector<16x8xf32>, vector<16x8xf32> -> vector<64x8xf32>
    %35 = vector.extract_strided_slice %24 {offsets = [0, 64], sizes = [16, 8], strides = [1, 1]} : vector<16x96xf32> to vector<16x8xf32>
    %36 = vector.extract_strided_slice %24 {offsets = [0, 72], sizes = [16, 8], strides = [1, 1]} : vector<16x96xf32> to vector<16x8xf32>
    %37 = vector.extract_strided_slice %24 {offsets = [0, 80], sizes = [16, 8], strides = [1, 1]} : vector<16x96xf32> to vector<16x8xf32>
    %38 = vector.extract_strided_slice %24 {offsets = [0, 88], sizes = [16, 8], strides = [1, 1]} : vector<16x96xf32> to vector<16x8xf32>
    %39 = tpu.concatenate %35, %36, %37, %38 in 0 : vector<16x8xf32>, vector<16x8xf32>, vector<16x8xf32>, vector<16x8xf32> -> vector<64x8xf32>
    "tpu.trace_start"() <{level = 10 : i32, message = "qd,kd->qk"}> : () -> ()
    %cst_19 = arith.constant dense<0.000000e+00> : vector<64x64xf32>
    %40 = tpu.matmul %29, %34, %cst_19 {dimension_numbers = #tpu.dot_dimension_numbers<[1], [1], [0], [0], [0, 0, 1, 0], [], []>} : vector<64x8xf32>, vector<64x8xf32>, vector<64x64xf32> -> vector<64x64xf32>
    "tpu.trace_stop"() : () -> ()
    %cst_20 = arith.constant 0.353553385 : f32
    %41 = vector.broadcast %cst_20 : f32 to vector<64x64xf32>
    %42 = arith.mulf %40, %41 : vector<64x64xf32>
    %43 = arith.addf %42, %14 : vector<64x64xf32>
    %cst_21 = arith.constant dense<0xFF800000> : vector<64xf32>
    %44 = vector.multi_reduction <maximumf>, %43, %cst_21 [1] : vector<64x64xf32> to vector<64xf32>
    %45 = vector.shape_cast %44 : vector<64xf32> to vector<64x1xf32>
    %46 = vector.broadcast %45 : vector<64x1xf32> to vector<64x64xf32>
    %47 = arith.subf %43, %46 : vector<64x64xf32>
    %48 = math.exp %47 : vector<64x64xf32>
    %cst_22 = arith.constant dense<0.000000e+00> : vector<64xf32>
    %49 = vector.multi_reduction <add>, %48, %cst_22 [1] : vector<64x64xf32> to vector<64xf32>
    %50 = vector.shape_cast %49 : vector<64xf32> to vector<64x1xf32>
    %51 = vector.broadcast %50 : vector<64x1xf32> to vector<64x64xf32>
    %52 = arith.divf %48, %51 : vector<64x64xf32>
    %cst_23 = arith.constant dense<0.000000e+00> : vector<64x8xf32>
    %53 = tpu.matmul %52, %39, %cst_23 {dimension_numbers = #tpu.dot_dimension_numbers<[1], [0], [0], [1], [0, 0, 1, 1], [], []>} : vector<64x64xf32>, vector<64x8xf32>, vector<64x8xf32> -> vector<64x8xf32>
    %54 = vector.extract_strided_slice %53 {offsets = [0, 0], sizes = [16, 8], strides = [1, 1]} : vector<64x8xf32> to vector<16x8xf32>
    %55 = vector.extract_strided_slice %53 {offsets = [16, 0], sizes = [16, 8], strides = [1, 1]} : vector<64x8xf32> to vector<16x8xf32>
    %56 = vector.extract_strided_slice %53 {offsets = [32, 0], sizes = [16, 8], strides = [1, 1]} : vector<64x8xf32> to vector<16x8xf32>
    %57 = vector.extract_strided_slice %53 {offsets = [48, 0], sizes = [16, 8], strides = [1, 1]} : vector<64x8xf32> to vector<16x8xf32>
    %58 = tpu.concatenate %54, %55, %56, %57 in 1 : vector<16x8xf32>, vector<16x8xf32>, vector<16x8xf32>, vector<16x8xf32> -> vector<16x32xf32>
    %cst_24 = arith.constant dense<0.000000e+00> : vector<16x32xf32>
    %59 = tpu.matmul %58, %3, %cst_24 {dimension_numbers = #tpu.dot_dimension_numbers<[1], [0], [0], [1], [0, 0, 1, 1], [], []>} : vector<16x32xf32>, vector<32x32xf32>, vector<16x32xf32> -> vector<16x32xf32>
    %60 = arith.addf %59, %23 : vector<16x32xf32>
    %cst_25 = arith.constant dense<0.000000e+00> : vector<16xf32>
    %61 = vector.multi_reduction <add>, %60, %cst_25 [1] : vector<16x32xf32> to vector<16xf32>
    %62 = vector.shape_cast %61 : vector<16xf32> to vector<16x1xf32>
    %cst_26 = arith.constant 3.200000e+01 : f32
    %63 = vector.broadcast %cst_26 : f32 to vector<16x1xf32>
    %64 = arith.divf %62, %63 : vector<16x1xf32>
    %65 = vector.broadcast %64 : vector<16x1xf32> to vector<16x32xf32>
    %66 = arith.subf %60, %65 : vector<16x32xf32>
    %67 = arith.mulf %66, %66 : vector<16x32xf32>
    %cst_27 = arith.constant dense<0.000000e+00> : vector<16xf32>
    %68 = vector.multi_reduction <add>, %67, %cst_27 [1] : vector<16x32xf32> to vector<16xf32>
    %69 = vector.shape_cast %68 : vector<16xf32> to vector<16x1xf32>
    %cst_28 = arith.constant 3.200000e+01 : f32
    %70 = vector.broadcast %cst_28 : f32 to vector<16x1xf32>
    %71 = arith.divf %69, %70 : vector<16x1xf32>
    %72 = vector.broadcast %64 : vector<16x1xf32> to vector<16x32xf32>
    %73 = arith.subf %60, %72 : vector<16x32xf32>
    %cst_29 = arith.constant 9.99999974E-6 : f32
    %74 = vector.broadcast %cst_29 : f32 to vector<16x1xf32>
    %75 = arith.addf %71, %74 : vector<16x1xf32>
    %76 = math.rsqrt %75 : vector<16x1xf32>
    %77 = vector.broadcast %76 : vector<16x1xf32> to vector<16x32xf32>
    %78 = arith.mulf %73, %77 : vector<16x32xf32>
    %79 = vector.broadcast %7 : vector<1x32xf32> to vector<16x32xf32>
    %80 = arith.mulf %78, %79 : vector<16x32xf32>
    %81 = vector.broadcast %8 : vector<1x32xf32> to vector<16x32xf32>
    %82 = arith.addf %80, %81 : vector<16x32xf32>
    %cst_30 = arith.constant dense<0.000000e+00> : vector<16x64xf32>
    %83 = tpu.matmul %82, %4, %cst_30 {dimension_numbers = #tpu.dot_dimension_numbers<[1], [0], [0], [1], [0, 0, 1, 1], [], []>} : vector<16x32xf32>, vector<32x64xf32>, vector<16x64xf32> -> vector<16x64xf32>
    %84 = vector.broadcast %11 : vector<1x64xf32> to vector<16x64xf32>
    %85 = arith.addf %83, %84 : vector<16x64xf32>
    %cst_31 = arith.constant 0.000000e+00 : f32
    %86 = vector.broadcast %cst_31 : f32 to vector<16x64xf32>
    %87 = arith.maximumf %85, %86 : vector<16x64xf32>
    %cst_32 = arith.constant dense<0.000000e+00> : vector<16x32xf32>
    %88 = tpu.matmul %87, %5, %cst_32 {dimension_numbers = #tpu.dot_dimension_numbers<[1], [0], [0], [1], [0, 0, 1, 1], [], []>} : vector<16x64xf32>, vector<64x32xf32>, vector<16x32xf32> -> vector<16x32xf32>
    %89 = vector.broadcast %12 : vector<1x32xf32> to vector<16x32xf32>
    %90 = arith.addf %88, %89 : vector<16x32xf32>
    %91 = arith.addf %90, %82 : vector<16x32xf32>
    %cst_33 = arith.constant dense<0.000000e+00> : vector<16xf32>
    %92 = vector.multi_reduction <add>, %91, %cst_33 [1] : vector<16x32xf32> to vector<16xf32>
    %93 = vector.shape_cast %92 : vector<16xf32> to vector<16x1xf32>
    %cst_34 = arith.constant 3.200000e+01 : f32
    %94 = vector.broadcast %cst_34 : f32 to vector<16x1xf32>
    %95 = arith.divf %93, %94 : vector<16x1xf32>
    %96 = vector.broadcast %95 : vector<16x1xf32> to vector<16x32xf32>
    %97 = arith.subf %91, %96 : vector<16x32xf32>
    %98 = arith.mulf %97, %97 : vector<16x32xf32>
    %cst_35 = arith.constant dense<0.000000e+00> : vector<16xf32>
    %99 = vector.multi_reduction <add>, %98, %cst_35 [1] : vector<16x32xf32> to vector<16xf32>
    %100 = vector.shape_cast %99 : vector<16xf32> to vector<16x1xf32>
    %cst_36 = arith.constant 3.200000e+01 : f32
    %101 = vector.broadcast %cst_36 : f32 to vector<16x1xf32>
    %102 = arith.divf %100, %101 : vector<16x1xf32>
    %103 = vector.broadcast %95 : vector<16x1xf32> to vector<16x32xf32>
    %104 = arith.subf %91, %103 : vector<16x32xf32>
    %cst_37 = arith.constant 9.99999974E-6 : f32
    %105 = vector.broadcast %cst_37 : f32 to vector<16x1xf32>
    %106 = arith.addf %102, %105 : vector<16x1xf32>
    %107 = math.rsqrt %106 : vector<16x1xf32>
    %108 = vector.broadcast %107 : vector<16x1xf32> to vector<16x32xf32>
    %109 = arith.mulf %104, %108 : vector<16x32xf32>
    %110 = vector.broadcast %9 : vector<1x32xf32> to vector<16x32xf32>
    %111 = arith.mulf %109, %110 : vector<16x32xf32>
    %112 = vector.broadcast %10 : vector<1x32xf32> to vector<16x32xf32>
    %113 = arith.addf %111, %112 : vector<16x32xf32>
    %cst_38 = arith.constant dense<0.000000e+00> : vector<8x32xf32>
    %114 = tpu.matmul %15, %113, %cst_38 {dimension_numbers = #tpu.dot_dimension_numbers<[1], [0], [0], [1], [0, 0, 1, 1], [], []>} : vector<8x16xf32>, vector<16x32xf32>, vector<8x32xf32> -> vector<8x32xf32>
    %cst_39 = arith.constant dense<0.000000e+00> : vector<8x128xf32>
    %115 = tpu.matmul %114, %6, %cst_39 {dimension_numbers = #tpu.dot_dimension_numbers<[1], [0], [0], [1], [0, 0, 1, 1], [], []>} : vector<8x32xf32>, vector<32x128xf32>, vector<8x128xf32> -> vector<8x128xf32>
    %116 = vector.broadcast %13 : vector<1x128xf32> to vector<8x128xf32>
    %117 = arith.addf %115, %116 : vector<8x128xf32>
    %cst_40 = arith.constant dense<0xFF800000> : vector<8xf32>
    %118 = vector.multi_reduction <maximumf>, %117, %cst_40 [1] : vector<8x128xf32> to vector<8xf32>
    %119 = vector.shape_cast %118 : vector<8xf32> to vector<8x1xf32>
    %120 = vector.broadcast %119 : vector<8x1xf32> to vector<8x128xf32>
    %121 = arith.subf %117, %120 : vector<8x128xf32>
    %122 = math.exp %121 : vector<8x128xf32>
    %cst_41 = arith.constant dense<0.000000e+00> : vector<8xf32>
    %123 = vector.multi_reduction <add>, %122, %cst_41 [1] : vector<8x128xf32> to vector<8xf32>
    %124 = vector.shape_cast %123 : vector<8xf32> to vector<8x1xf32>
    %125 = math.log %124 : vector<8x1xf32>
    %126 = vector.broadcast %125 : vector<8x1xf32> to vector<8x128xf32>
    %127 = arith.subf %121, %126 : vector<8x128xf32>
    %c0_42 = arith.constant 0 : index
    %c0_43 = arith.constant 0 : index
    %128 = vector.load %arg2[%c0_42, %c0_43] : memref<8x128xf32, #tpu.memory_space<vmem>>, vector<8x128xf32>
    tpu.vector_store %arg2[%c0_42, %c0_43], %127 {strides = array<i32>} : memref<8x128xf32, #tpu.memory_space<vmem>>, vector<8x128xf32>,
    return
  }
}

</mosaic_0001>

<llo_original>
// kernel: transformer_forward.1
$region0: #{transformer_forward.1}
  #allocation0 [shape = 'u32[]', space=smem, size = 0x4, offset = 0x4, fixed_abs, tag = 'smem constant byte address 0x4 - core index']
  #allocation1 [shape = 'u32[72,128]{1,0:T(1,128)}', space=vmem, size = 0x9000, scoped, tag = 'internal scratch']
  %s0 = inlined_call_operand.vmem [shape: s32[16,1], index: 0, kind: input, shape index: {}]
  %s1 = inlined_call_operand.hbm [shape: f32[344,128], index: 1, kind: input, shape index: {}]
  %s2 = inlined_call_operand.vmem [shape: f32[8,128], index: 2, kind: output, shape index: {}]
  %s3 = sld [smem:[#allocation0]]
  $region22: #{transformer_forward.1} parent=0
    _
  %s5 = ssub.s32 1, %s3
  %s6 = scalar_select 0, %s5, %s3
  $region1: #{transformer_forward.1} parent=0
    #allocation2 [shape = 'u8[176128]{0}', space=vmem, size = 0x2b000, scoped, tag = 'input window, operand 1, single buffered']
    #allocation3 [shape = 's32[1]{0}', space=sflag, size = 0x4, scoped, tag = 'scoped memory for transformer_forward.1']
    %7 = vsyncpa [#allocation3], 0
    // Predicated region
    $region2: #{transformer_forward.1} parent=1 // pred_check
      _
    $region3: #{transformer_forward.1} parent=1 // pred_check_branch
      %9 = sbr.rel (0) target = $region5
    $region4: #{transformer_forward.1} parent=1 // pred_region
      _
    $region5: #{transformer_forward.1} parent=1 // pred_fallthru
      _
    // Predicated region
    $region6: #{transformer_forward.1} parent=1 // pred_check
      _
    $region7: #{transformer_forward.1} parent=1 // pred_check_branch
      %11 = sbr.rel (0) target = $region9
    $region8: #{transformer_forward.1} parent=1 // pred_region
      %13 = vsyncadd [#allocation3], 0
      %s14 = sshll.u32 %s1, 4
      %s15 = int_to_ptr.hbm [resolvable:$true] %s14
      %s16 = sshll.u32 [#allocation2], 4
      %s17 = int_to_ptr.vmem [resolvable:$true] %s16
      %22 = dma.hbm_to_vmem [thread:$0]  %s15, 5504, %s17, [#allocation3], 128, 128, 8
    $region9: #{transformer_forward.1} parent=1 // pred_fallthru
      _
    // Predicated region
    $region10: #{transformer_forward.1} parent=1 // pred_check
      _
    $region11: #{transformer_forward.1} parent=1 // pred_check_branch
      %24 = sbr.rel (0) target = $region13
    $region12: #{transformer_forward.1} parent=1 // pred_region
      %26 = dma.done [#allocation3], 5504
    $region13: #{transformer_forward.1} parent=1 // pred_fallthru
      _
    %v27 = vld [vmem:[#allocation2] sm:$0xff]
    %v28 = vld [vmem:[#allocation2 + $0x8] sm:$0xff]
    %v29 = vld [vmem:[#allocation2 + $0x10] sm:$0xff]
    %v30 = vld [vmem:[#allocation2 + $0x18] sm:$0xff]
    %v31 = vld [vmem:[#allocation2 + $0x20] sm:$0xff]
    %v32 = vld [vmem:[#allocation2 + $0x28] sm:$0xff]
    %v33 = vld [vmem:[#allocation2 + $0x30] sm:$0x3]
    %v34 = vld [vmem:[#allocation2 + $0x38] sm:$0xff]
    %v35 = vld [vmem:[#allocation2 + $0x40] sm:$0xff]
    %v36 = vld [vmem:[#allocation2 + $0x48] sm:$0xff]
    %v37 = vld [vmem:[#allocation2 + $0x50] sm:$0xff]
    %v38 = vld [vmem:[#allocation2 + $0x58] sm:$0xff]
    %v39 = vld [vmem:[#allocation2 + $0x60] sm:$0xff]
    %v40 = vld [vmem:[#allocation2 + $0x68] sm:$0xff]
    %v41 = vld [vmem:[#allocation2 + $0x70] sm:$0xff]
    %v42 = vld [vmem:[#allocation2 + $0x78] sm:$0xff]
    %v43 = vld [vmem:[#allocation2 + $0x80] sm:$0xff]
    %v44 = vld [vmem:[#allocation2 + $0x88] sm:$0xff]
    %v45 = vld [vmem:[#allocation2 + $0x90] sm:$0xff]
    %v46 = vld [vmem:[#allocation2 + $0x98] sm:$0xff]
    %v47 = vld [vmem:[#allocation2 + $0xa0] sm:$0xff]
    %v48 = vld [vmem:[#allocation2 + $0xa8] sm:$0xff]
    %v49 = vld [vmem:[#allocation2 + $0xb0] sm:$0xff]
    %v50 = vld [vmem:[#allocation2 + $0xb8] sm:$0xff]
    %v51 = vld [vmem:[#allocation2 + $0xc0] sm:$0xff]
    %v52 = vld [vmem:[#allocation2 + $0xc8] sm:$0xff]
    %v53 = vld [vmem:[#allocation2 + $0xd0] sm:$0xff]
    %v54 = vld [vmem:[#allocation2 + $0xd8] sm:$0xff]
    %v55 = vld [vmem:[#allocation2 + $0xe0] sm:$0xff]
    %v56 = vld [vmem:[#allocation2 + $0xe8] sm:$0xff]
    %v57 = vld [vmem:[#allocation2 + $0xf0] sm:$0xff]
    %v58 = vld [vmem:[#allocation2 + $0xf8] sm:$0xff]
    %v59 = vld [vmem:[#allocation2 + $0x100] sm:$0xff]
    %v60 = vld [vmem:[#allocation2 + $0x108] sm:$0x1]
    %v61 = vld [vmem:[#allocation2 + $0x109] sm:$0x1]
    %v62 = vld [vmem:[#allocation2 + $0x10a] sm:$0x1]
    %v63 = vld [vmem:[#allocation2 + $0x10b] sm:$0x1]
    %v64 = vld [vmem:[#allocation2 + $0x10c] sm:$0x1]
    %v65 = vld [vmem:[#allocation2 + $0x10d] sm:$0x1]
    %v66 = vld [vmem:[#allocation2 + $0x10e] sm:$0x1]
    %v67 = vld [vmem:[#allocation2 + $0x110] sm:$0xff]
    %v68 = vld [vmem:[#allocation2 + $0x118] sm:$0xff]
    %v69 = vld [vmem:[#allocation2 + $0x120] sm:$0xff]
    %v70 = vld [vmem:[#allocation2 + $0x128] sm:$0xff]
    %v71 = vld [vmem:[#allocation2 + $0x130] sm:$0xff]
    %v72 = vld [vmem:[#allocation2 + $0x138] sm:$0xff]
    %v73 = vld [vmem:[#allocation2 + $0x140] sm:$0xff]
    %v74 = vld [vmem:[#allocation2 + $0x148] sm:$0xff]
    %v75 = vld [vmem:[#allocation2 + $0x150] sm:$0xff]
    %v76 = vld [vmem:[%s0] sm:$0xff]
    %v77 = vld [vmem:[%s0 + $0x8] sm:$0xff]
    %v78 = vlaneseq
    %v79 = vand.u32 %v78, 127
    %80 = vset.pattern.permute.xlu0 0
    %81 = vperm.xlu0 %80, %v76
    %v82 = vpop.permute.xlu0 %81
    %83 = vset.pattern.permute.xlu0 0
    %84 = vperm.xlu0 %83, %v77
    %v85 = vpop.permute.xlu0 %84
    %vm86 = vcmp.eq.s32.totalorder %v79, %v82
    %vm87 = vcmp.eq.s32.totalorder %v79, %v85
    %v88 = vsel %vm86, 1, 0
    %v89 = vsel %vm87, 1, 0
    %v90 = vcvt.s32.f32 %v88
    %v91 = vcvt.s32.f32 %v89
    %vm92 = vcmask 408576
    %v94 = vsel %vm92, %v90, 0
    %v97 = vsel %vm92, %v91, 0
    %vm99 = vcmask 1041408
    %v101 = vsel %vm99, %v33, 0
    %103 = vmatpush.msra.mxu0 0.0
    %104 = vmatpush.msra.mxu0 0.0
    %105 = vmatpush.msra.mxu0 0.0
    %106 = vmatpush.msra.mxu0 0.0
    %107 = vmatpush.msra.mxu0 0.0
    %108 = vmatpush.msra.mxu0 0.0
    %109 = vmatpush.msra.mxu0 0.0
    %110 = vmatpush.msra.mxu0 0.0
    %111 = vmatpush.msra.mxu0 0.0
    %112 = vmatpush.msra.mxu0 %v101
    %113 = vmatpush.msra.mxu0 %v32
    %114 = vmatpush.msra.mxu0 %v31
    %115 = vmatpush.msra.mxu0 %v30
    %116 = vmatpush.msra.mxu0 %v29
    %117 = vmatpush.msra.mxu0 %v28
    %118 = vmatpush.msra.mxu0 %v27
    %119 = vmatmul.f32.gmra.mxu0 %v94
    %v120 = vpop.f32.mrf.mxu0
    %v121 = vadd.f32 %v34, %v120
    %122 = vmatmul.f32.gmra.mxu0 %v97
    %v123 = vpop.f32.mrf.mxu0
    %v124 = vadd.f32 %v35, %v123
    %125 = vdwg.mxu0
    %vm126 = vcmask 261120
    %v128 = vsel %vm126, %v121, 0
    %v131 = vsel %vm126, %v124, 0
    %133 = vmatpush.msra.mxu0 0.0
    %134 = vmatpush.msra.mxu0 0.0
    %135 = vmatpush.msra.mxu0 0.0
    %136 = vmatpush.msra.mxu0 0.0
    %137 = vmatpush.msra.mxu0 0.0
    %138 = vmatpush.msra.mxu0 0.0
    %139 = vmatpush.msra.mxu0 0.0
    %140 = vmatpush.msra.mxu0 0.0
    %141 = vmatpush.msra.mxu0 0.0
    %142 = vmatpush.msra.mxu0 0.0
    %143 = vmatpush.msra.mxu0 0.0
    %144 = vmatpush.msra.mxu0 0.0
    %145 = vmatpush.msra.mxu0 %v39
    %146 = vmatpush.msra.mxu0 %v38
    %147 = vmatpush.msra.mxu0 %v37
    %148 = vmatpush.msra.mxu0 %v36
    %149 = vmatmul.f32.gmra.mxu0 %v128
    %v150 = vpop.f32.mrf.mxu0
    %v151 = vadd.f32 0.0, %v150
    %152 = vmatmul.f32.gmra.mxu0 %v131
    %v153 = vpop.f32.mrf.mxu0
    %v154 = vadd.f32 0.0, %v153
    %155 = vdwg.mxu0
    %158 = vrot.lane.b32.xlu0 %v151, 120
    %v159 = vpop.permute.xlu0 %158
    %160 = vrot.lane.b32.xlu0 %v154, 120
    %v161 = vpop.permute.xlu0 %160
    %162 = vrot.lane.b32.xlu0 %v151, 112
    %v163 = vpop.permute.xlu0 %162
    %164 = vrot.lane.b32.xlu0 %v154, 112
    %v165 = vpop.permute.xlu0 %164
    %166 = vrot.lane.b32.xlu0 %v151, 104
    %v167 = vpop.permute.xlu0 %166
    %168 = vrot.lane.b32.xlu0 %v154, 104
    %v169 = vpop.permute.xlu0 %168
    %170 = vrot.lane.b32.xlu0 %v151, 96
    %v171 = vpop.permute.xlu0 %170
    %172 = vrot.lane.b32.xlu0 %v154, 96
    %v173 = vpop.permute.xlu0 %172
    %174 = vrot.lane.b32.xlu0 %v159, 96
    %v175 = vpop.permute.xlu0 %174
    %176 = vrot.lane.b32.xlu0 %v161, 96
    %v177 = vpop.permute.xlu0 %176
    %178 = vrot.lane.b32.xlu0 %v163, 96
    %v179 = vpop.permute.xlu0 %178
    %180 = vrot.lane.b32.xlu0 %v165, 96
    %v181 = vpop.permute.xlu0 %180
    %182 = vrot.lane.b32.xlu0 %v167, 96
    %v183 = vpop.permute.xlu0 %182
    %184 = vrot.lane.b32.xlu0 %v169, 96
    %v185 = vpop.permute.xlu0 %184
    %vm186 = vcmask 64512
    %v187 = vsel %vm186, %v151, 0
    %v189 = vsel %vm186, %v154, 0
    %v191 = vsel %vm186, %v159, 0
    %v193 = vsel %vm186, %v161, 0
    %v195 = vsel %vm186, %v163, 0
    %v197 = vsel %vm186, %v165, 0
    %v199 = vsel %vm186, %v167, 0
    %v201 = vsel %vm186, %v169, 0
    %v203 = vsel %vm186, %v171, 0
    %v205 = vsel %vm186, %v173, 0
    %v207 = vsel %vm186, %v175, 0
    %v209 = vsel %vm186, %v177, 0
    %v211 = vsel %vm186, %v179, 0
    %v213 = vsel %vm186, %v181, 0
    %v215 = vsel %vm186, %v183, 0
    %v217 = vsel %vm186, %v185, 0
    %219 = vmatpush.xpose.msra.mxu0 0.0
    %220 = vmatpush.xpose.msra.mxu0 0.0
    %221 = vmatpush.xpose.msra.mxu0 0.0
    %222 = vmatpush.xpose.msra.mxu0 0.0
    %223 = vmatpush.xpose.msra.mxu0 0.0
    %224 = vmatpush.xpose.msra.mxu0 0.0
    %225 = vmatpush.xpose.msra.mxu0 0.0
    %226 = vmatpush.xpose.msra.mxu0 0.0
    %227 = vmatpush.xpose.msra.mxu0 %v217
    %228 = vmatpush.xpose.msra.mxu0 %v215
    %229 = vmatpush.xpose.msra.mxu0 %v213
    %230 = vmatpush.xpose.msra.mxu0 %v211
    %231 = vmatpush.xpose.msra.mxu0 %v209
    %232 = vmatpush.xpose.msra.mxu0 %v207
    %233 = vmatpush.xpose.msra.mxu0 %v205
    %234 = vmatpush.xpose.msra.mxu0 %v203
    %235 = vmatmul.f32.gmra.mxu0 %v187
    %v236 = vpop.f32.mrf.mxu0
    %v237 = vadd.f32 0.0, %v236
    %238 = vmatmul.f32.gmra.mxu0 %v189
    %v239 = vpop.f32.mrf.mxu0
    %v240 = vadd.f32 0.0, %v239
    %241 = vmatmul.f32.gmra.mxu0 %v191
    %v242 = vpop.f32.mrf.mxu0
    %v243 = vadd.f32 0.0, %v242
    %244 = vmatmul.f32.gmra.mxu0 %v193
    %v245 = vpop.f32.mrf.mxu0
    %v246 = vadd.f32 0.0, %v245
    %247 = vmatmul.f32.gmra.mxu0 %v195
    %v248 = vpop.f32.mrf.mxu0
    %v249 = vadd.f32 0.0, %v248
    %250 = vmatmul.f32.gmra.mxu0 %v197
    %v251 = vpop.f32.mrf.mxu0
    %v252 = vadd.f32 0.0, %v251
    %253 = vmatmul.f32.gmra.mxu0 %v199
    %v254 = vpop.f32.mrf.mxu0
    %v255 = vadd.f32 0.0, %v254
    %256 = vmatmul.f32.gmra.mxu0 %v201
    %v257 = vpop.f32.mrf.mxu0
    %v258 = vadd.f32 0.0, %v257
    %259 = vdwg.mxu0
    %v260 = vmul.f32 %v237, 0.35355338
    %v261 = vmul.f32 %v240, 0.35355338
    %v262 = vmul.f32 %v243, 0.35355338
    %v263 = vmul.f32 %v246, 0.35355338
    %v264 = vmul.f32 %v249, 0.35355338
    %v265 = vmul.f32 %v252, 0.35355338
    %v266 = vmul.f32 %v255, 0.35355338
    %v267 = vmul.f32 %v258, 0.35355338
    %v268 = vadd.f32 %v260, %v67
    %v269 = vadd.f32 %v261, %v68
    %v270 = vadd.f32 %v262, %v69
    %v271 = vadd.f32 %v263, %v70
    %v272 = vadd.f32 %v264, %v71
    %v273 = vadd.f32 %v265, %v72
    %v274 = vadd.f32 %v266, %v73
    %v275 = vadd.f32 %v267, %v74
    %vm276 = vcmask 523264
    %v277 = vsel %vm276, %v268, -inf
    %278 = vmax.xlane.f32.xlu0 %v277
    %v279 = vpop.xlane.xlu0 %278
    %v280 = vsel %vm276, %v269, -inf
    %281 = vmax.xlane.f32.xlu0 %v280
    %v282 = vpop.xlane.xlu0 %281
    %v283 = vsel %vm276, %v270, -inf
    %284 = vmax.xlane.f32.xlu0 %v283
    %v285 = vpop.xlane.xlu0 %284
    %v286 = vsel %vm276, %v271, -inf
    %287 = vmax.xlane.f32.xlu0 %v286
    %v288 = vpop.xlane.xlu0 %287
    %v289 = vsel %vm276, %v272, -inf
    %290 = vmax.xlane.f32.xlu0 %v289
    %v291 = vpop.xlane.xlu0 %290
    %v292 = vsel %vm276, %v273, -inf
    %293 = vmax.xlane.f32.xlu0 %v292
    %v294 = vpop.xlane.xlu0 %293
    %v295 = vsel %vm276, %v274, -inf
    %296 = vmax.xlane.f32.xlu0 %v295
    %v297 = vpop.xlane.xlu0 %296
    %v298 = vsel %vm276, %v275, -inf
    %299 = vmax.xlane.f32.xlu0 %v298
    %v300 = vpop.xlane.xlu0 %299
    %v301 = vsub.f32 %v268, %v279
    %v302 = vsub.f32 %v269, %v282
    %v303 = vsub.f32 %v270, %v285
    %v304 = vsub.f32 %v271, %v288
    %v305 = vsub.f32 %v272, %v291
    %v306 = vsub.f32 %v273, %v294
    %v307 = vsub.f32 %v274, %v297
    %v308 = vsub.f32 %v275, %v300
    %v309 = vmul.f32 %v301, 1.442695
    %v310 = vpow.pop %v309
    %v311 = vmul.f32 %v302, 1.442695
    %v312 = vpow.pop %v311
    %v313 = vmul.f32 %v303, 1.442695
    %v314 = vpow.pop %v313
    %v315 = vmul.f32 %v304, 1.442695
    %v316 = vpow.pop %v315
    %v317 = vmul.f32 %v305, 1.442695
    %v318 = vpow.pop %v317
    %v319 = vmul.f32 %v306, 1.442695
    %v320 = vpow.pop %v319
    %v321 = vmul.f32 %v307, 1.442695
    %v322 = vpow.pop %v321
    %v323 = vmul.f32 %v308, 1.442695
    %v324 = vpow.pop %v323
    %v325 = vsel %vm276, %v310, 0.0
    %326 = vadd.xlane.f32.xlu0 %v325
    %v327 = vpop.xlane.xlu0 %326
    %v328 = vsel %vm276, %v312, 0.0
    %329 = vadd.xlane.f32.xlu0 %v328
    %v330 = vpop.xlane.xlu0 %329
    %v331 = vsel %vm276, %v314, 0.0
    %332 = vadd.xlane.f32.xlu0 %v331
    %v333 = vpop.xlane.xlu0 %332
    %v334 = vsel %vm276, %v316, 0.0
    %335 = vadd.xlane.f32.xlu0 %v334
    %v336 = vpop.xlane.xlu0 %335
    %v337 = vsel %vm276, %v318, 0.0
    %338 = vadd.xlane.f32.xlu0 %v337
    %v339 = vpop.xlane.xlu0 %338
    %v340 = vsel %vm276, %v320, 0.0
    %341 = vadd.xlane.f32.xlu0 %v340
    %v342 = vpop.xlane.xlu0 %341
    %v343 = vsel %vm276, %v322, 0.0
    %344 = vadd.xlane.f32.xlu0 %v343
    %v345 = vpop.xlane.xlu0 %344
    %v346 = vsel %vm276, %v324, 0.0
    %347 = vadd.xlane.f32.xlu0 %v346
    %v348 = vpop.xlane.xlu0 %347
    %v349 = vrcp.pop %v327
    %v350 = vmul.f32 %v327, %v349
    %v351 = vsub.f32 1.0, %v350
    %v352 = vmul.f32 %v349, %v351
    %v353 = vadd.f32 %v349, %v352
    %vm354 = vweird.f32 %v327
    %vm355 = vweird.f32 %v349
    %vm356 = vmor %vm354, %vm355
    %v357 = vsel %vm356, %v349, %v353
    %v358 = vand.u32 2147483647, %v327
    %vm359 = vcmp.eq.f32.partialorder %v358, 8.507059e+37
    %v360 = vand.u32 %v327, 2147483648
    %v361 = vor.u32 1.1754944e-38, %v360
    %v362 = vsel %vm359, %v361, %v357
    %v363 = vmul.f32 %v310, %v362
    %v364 = vrcp.pop %v330
    %v365 = vmul.f32 %v330, %v364
    %v366 = vsub.f32 1.0, %v365
    %v367 = vmul.f32 %v364, %v366
    %v368 = vadd.f32 %v364, %v367
    %vm369 = vweird.f32 %v330
    %vm370 = vweird.f32 %v364
    %vm371 = vmor %vm369, %vm370
    %v372 = vsel %vm371, %v364, %v368
    %v373 = vand.u32 2147483647, %v330
    %vm374 = vcmp.eq.f32.partialorder %v373, 8.507059e+37
    %v375 = vand.u32 %v330, 2147483648
    %v376 = vor.u32 1.1754944e-38, %v375
    %v377 = vsel %vm374, %v376, %v372
    %v378 = vmul.f32 %v312, %v377
    %v379 = vrcp.pop %v333
    %v380 = vmul.f32 %v333, %v379
    %v381 = vsub.f32 1.0, %v380
    %v382 = vmul.f32 %v379, %v381
    %v383 = vadd.f32 %v379, %v382
    %vm384 = vweird.f32 %v333
    %vm385 = vweird.f32 %v379
    %vm386 = vmor %vm384, %vm385
    %v387 = vsel %vm386, %v379, %v383
    %v388 = vand.u32 2147483647, %v333
    %vm389 = vcmp.eq.f32.partialorder %v388, 8.507059e+37
    %v390 = vand.u32 %v333, 2147483648
    %v391 = vor.u32 1.1754944e-38, %v390
    %v392 = vsel %vm389, %v391, %v387
    %v393 = vmul.f32 %v314, %v392
    %v394 = vrcp.pop %v336
    %v395 = vmul.f32 %v336, %v394
    %v396 = vsub.f32 1.0, %v395
    %v397 = vmul.f32 %v394, %v396
    %v398 = vadd.f32 %v394, %v397
    %vm399 = vweird.f32 %v336
    %vm400 = vweird.f32 %v394
    %vm401 = vmor %vm399, %vm400
    %v402 = vsel %vm401, %v394, %v398
    %v403 = vand.u32 2147483647, %v336
    %vm404 = vcmp.eq.f32.partialorder %v403, 8.507059e+37
    %v405 = vand.u32 %v336, 2147483648
    %v406 = vor.u32 1.1754944e-38, %v405
    %v407 = vsel %vm404, %v406, %v402
    %v408 = vmul.f32 %v316, %v407
    %v409 = vrcp.pop %v339
    %v410 = vmul.f32 %v339, %v409
    %v411 = vsub.f32 1.0, %v410
    %v412 = vmul.f32 %v409, %v411
    %v413 = vadd.f32 %v409, %v412
    %vm414 = vweird.f32 %v339
    %vm415 = vweird.f32 %v409
    %vm416 = vmor %vm414, %vm415
    %v417 = vsel %vm416, %v409, %v413
    %v418 = vand.u32 2147483647, %v339
    %vm419 = vcmp.eq.f32.partialorder %v418, 8.507059e+37
    %v420 = vand.u32 %v339, 2147483648
    %v421 = vor.u32 1.1754944e-38, %v420
    %v422 = vsel %vm419, %v421, %v417
    %v423 = vmul.f32 %v318, %v422
    %v424 = vrcp.pop %v342
    %v425 = vmul.f32 %v342, %v424
    %v426 = vsub.f32 1.0, %v425
    %v427 = vmul.f32 %v424, %v426
    %v428 = vadd.f32 %v424, %v427
    %vm429 = vweird.f32 %v342
    %vm430 = vweird.f32 %v424
    %vm431 = vmor %vm429, %vm430
    %v432 = vsel %vm431, %v424, %v428
    %v433 = vand.u32 2147483647, %v342
    %vm434 = vcmp.eq.f32.partialorder %v433, 8.507059e+37
    %v435 = vand.u32 %v342, 2147483648
    %v436 = vor.u32 1.1754944e-38, %v435
    %v437 = vsel %vm434, %v436, %v432
    %v438 = vmul.f32 %v320, %v437
    %v439 = vrcp.pop %v345
    %v440 = vmul.f32 %v345, %v439
    %v441 = vsub.f32 1.0, %v440
    %v442 = vmul.f32 %v439, %v441
    %v443 = vadd.f32 %v439, %v442
    %vm444 = vweird.f32 %v345
    %vm445 = vweird.f32 %v439
    %vm446 = vmor %vm444, %vm445
    %v447 = vsel %vm446, %v439, %v443
    %v448 = vand.u32 2147483647, %v345
    %vm449 = vcmp.eq.f32.partialorder %v448, 8.507059e+37
    %v450 = vand.u32 %v345, 2147483648
    %v451 = vor.u32 1.1754944e-38, %v450
    %v452 = vsel %vm449, %v451, %v447
    %v453 = vmul.f32 %v322, %v452
    %v454 = vrcp.pop %v348
    %v455 = vmul.f32 %v348, %v454
    %v456 = vsub.f32 1.0, %v455
    %v457 = vmul.f32 %v454, %v456
    %v458 = vadd.f32 %v454, %v457
    %vm459 = vweird.f32 %v348
    %vm460 = vweird.f32 %v454
    %vm461 = vmor %vm459, %vm460
    %v462 = vsel %vm461, %v454, %v458
    %v463 = vand.u32 2147483647, %v348
    %vm464 = vcmp.eq.f32.partialorder %v463, 8.507059e+37
    %v465 = vand.u32 %v348, 2147483648
    %v466 = vor.u32 1.1754944e-38, %v465
    %v467 = vsel %vm464, %v466, %v462
    %v468 = vmul.f32 %v324, %v467
    %469 = vrot.lane.b32.xlu0 %v151, 64
    %v470 = vpop.permute.xlu0 %469
    %471 = vrot.lane.b32.xlu0 %v154, 64
    %v472 = vpop.permute.xlu0 %471
    %473 = vrot.lane.b32.xlu0 %v159, 64
    %v474 = vpop.permute.xlu0 %473
    %475 = vrot.lane.b32.xlu0 %v161, 64
    %v476 = vpop.permute.xlu0 %475
    %477 = vrot.lane.b32.xlu0 %v163, 64
    %v478 = vpop.permute.xlu0 %477
    %479 = vrot.lane.b32.xlu0 %v165, 64
    %v480 = vpop.permute.xlu0 %479
    %481 = vrot.lane.b32.xlu0 %v167, 64
    %v482 = vpop.permute.xlu0 %481
    %483 = vrot.lane.b32.xlu0 %v169, 64
    %v484 = vpop.permute.xlu0 %483
    %v494 = vsel %vm276, %v363, 0
    %v497 = vsel %vm276, %v378, 0
    %v500 = vsel %vm276, %v393, 0
    %v503 = vsel %vm276, %v408, 0
    %v506 = vsel %vm276, %v423, 0
    %v509 = vsel %vm276, %v438, 0
    %v512 = vsel %vm276, %v453, 0
    %v515 = vsel %vm276, %v468, 0
    %517 = vmatpush.msra.mxu0 0.0
    %518 = vmatpush.msra.mxu0 0.0
    %519 = vmatpush.msra.mxu0 0.0
    %520 = vmatpush.msra.mxu0 0.0
    %521 = vmatpush.msra.mxu0 0.0
    %522 = vmatpush.msra.mxu0 0.0
    %523 = vmatpush.msra.mxu0 0.0
    %524 = vmatpush.msra.mxu0 0.0
    %525 = vmatpush.msra.mxu0 %v484
    %526 = vmatpush.msra.mxu0 %v482
    %527 = vmatpush.msra.mxu0 %v480
    %528 = vmatpush.msra.mxu0 %v478
    %529 = vmatpush.msra.mxu0 %v476
    %530 = vmatpush.msra.mxu0 %v474
    %531 = vmatpush.msra.mxu0 %v472
    %532 = vmatpush.msra.mxu0 %v470
    %533 = vmatmul.f32.gmra.mxu0 %v494
    %v534 = vpop.f32.mrf.mxu0
    %v535 = vadd.f32 0.0, %v534
    %536 = vmatmul.f32.gmra.mxu0 %v497
    %v537 = vpop.f32.mrf.mxu0
    %v538 = vadd.f32 0.0, %v537
    %539 = vmatmul.f32.gmra.mxu0 %v500
    %v540 = vpop.f32.mrf.mxu0
    %v541 = vadd.f32 0.0, %v540
    %542 = vmatmul.f32.gmra.mxu0 %v503
    %v543 = vpop.f32.mrf.mxu0
    %v544 = vadd.f32 0.0, %v543
    %545 = vmatmul.f32.gmra.mxu0 %v506
    %v546 = vpop.f32.mrf.mxu0
    %v547 = vadd.f32 0.0, %v546
    %548 = vmatmul.f32.gmra.mxu0 %v509
    %v549 = vpop.f32.mrf.mxu0
    %v550 = vadd.f32 0.0, %v549
    %551 = vmatmul.f32.gmra.mxu0 %v512
    %v552 = vpop.f32.mrf.mxu0
    %v553 = vadd.f32 0.0, %v552
    %554 = vmatmul.f32.gmra.mxu0 %v515
    %v555 = vpop.f32.mrf.mxu0
    %v556 = vadd.f32 0.0, %v555
    %557 = vdwg.mxu0
    %560 = vrot.lane.b32.xlu0 %v541, 8
    %v561 = vpop.permute.xlu0 %560
    %562 = vrot.lane.b32.xlu0 %v544, 8
    %v563 = vpop.permute.xlu0 %562
    %568 = vrot.lane.b32.xlu0 %v547, 16
    %v569 = vpop.permute.xlu0 %568
    %570 = vrot.lane.b32.xlu0 %v550, 16
    %v571 = vpop.permute.xlu0 %570
    %576 = vrot.lane.b32.xlu0 %v553, 24
    %v577 = vpop.permute.xlu0 %576
    %578 = vrot.lane.b32.xlu0 %v556, 24
    %v579 = vpop.permute.xlu0 %578
    %v582 = vsel %vm186, %v535, %v561
    %v583 = vsel %vm186, %v538, %v563
    %vm584 = vcmask 130048
    %v585 = vsel %vm584, %v582, %v569
    %v586 = vsel %vm584, %v583, %v571
    %vm587 = vcmask 195584
    %v588 = vsel %vm587, %v585, %v577
    %v589 = vsel %vm587, %v586, %v579
    %v591 = vsel %vm126, %v588, 0
    %v594 = vsel %vm126, %v589, 0
    %596 = vmatpush.msra.mxu0 0.0
    %597 = vmatpush.msra.mxu0 0.0
    %598 = vmatpush.msra.mxu0 0.0
    %599 = vmatpush.msra.mxu0 0.0
    %600 = vmatpush.msra.mxu0 0.0
    %601 = vmatpush.msra.mxu0 0.0
    %602 = vmatpush.msra.mxu0 0.0
    %603 = vmatpush.msra.mxu0 0.0
    %604 = vmatpush.msra.mxu0 0.0
    %605 = vmatpush.msra.mxu0 0.0
    %606 = vmatpush.msra.mxu0 0.0
    %607 = vmatpush.msra.mxu0 0.0
    %608 = vmatpush.msra.mxu0 %v43
    %609 = vmatpush.msra.mxu0 %v42
    %610 = vmatpush.msra.mxu0 %v41
    %611 = vmatpush.msra.mxu0 %v40
    %612 = vmatmul.f32.gmra.mxu0 %v591
    %v613 = vpop.f32.mrf.mxu0
    %v614 = vadd.f32 %v121, %v613
    %615 = vmatmul.f32.gmra.mxu0 %v594
    %v616 = vpop.f32.mrf.mxu0
    %v617 = vadd.f32 %v124, %v616
    %618 = vdwg.mxu0
    %v619 = vsel %vm126, %v614, 0.0
    %620 = vadd.xlane.f32.xlu0 %v619
    %v621 = vpop.xlane.xlu0 %620
    %v622 = vsel %vm126, %v617, 0.0
    %623 = vadd.xlane.f32.xlu0 %v622
    %v624 = vpop.xlane.xlu0 %623
    %v625 = vrcp.pop 32.0
    %v626 = vmul.f32 32.0, %v625
    %v627 = vsub.f32 1.0, %v626
    %v628 = vmul.f32 %v625, %v627
    %v629 = vadd.f32 %v625, %v628
    %vm630 = vweird.f32 %v625
    %v631 = vsel %vm630, %v625, %v629
    %v632 = vmul.f32 %v621, %v631
    %v633 = vmul.f32 %v624, %v631
    %v634 = vsub.f32 %v614, %v632
    %v635 = vsub.f32 %v617, %v633
    %v636 = vmul.f32 %v634, %v634
    %v637 = vmul.f32 %v635, %v635
    %v638 = vsel %vm126, %v636, 0.0
    %639 = vadd.xlane.f32.xlu0 %v638
    %v640 = vpop.xlane.xlu0 %639
    %v641 = vsel %vm126, %v637, 0.0
    %642 = vadd.xlane.f32.xlu0 %v641
    %v643 = vpop.xlane.xlu0 %642
    %v644 = vmul.f32 %v640, %v631
    %v645 = vmul.f32 %v643, %v631
    %v646 = vadd.f32 %v644, 1e-05
    %v647 = vadd.f32 %v645, 1e-05
    %v648 = vrsqrt.pop %v646
    %v649 = vmul.f32 %v648, %v646
    %v650 = vmul.f32 %v649, %v648
    %v651 = vmul.f32 0.5, %v650
    %v652 = vsub.f32 1.5, %v651
    %v653 = vmul.f32 %v648, %v652
    %vm654 = vweird.f32 %v646
    %vm655 = vweird.f32 %v648
    %vm656 = vmor %vm654, %vm655
    %v657 = vsel %vm656, %v648, %v653
    %v658 = vrsqrt.pop %v647
    %v659 = vmul.f32 %v658, %v647
    %v660 = vmul.f32 %v659, %v658
    %v661 = vmul.f32 0.5, %v660
    %v662 = vsub.f32 1.5, %v661
    %v663 = vmul.f32 %v658, %v662
    %vm664 = vweird.f32 %v647
    %vm665 = vweird.f32 %v658
    %vm666 = vmor %vm664, %vm665
    %v667 = vsel %vm666, %v658, %v663
    %v668 = vmul.f32 %v634, %v657
    %v669 = vmul.f32 %v635, %v667
    %v670 = vperm.slane %v60, 0
    %v671 = vmul.f32 %v668, %v670
    %v672 = vmul.f32 %v669, %v670
    %v673 = vperm.slane %v61, 0
    %v674 = vadd.f32 %v671, %v673
    %v675 = vadd.f32 %v672, %v673
    %v676 = vperm.slane %v64, 0
    %v678 = vsel %vm126, %v674, 0
    %v681 = vsel %vm126, %v675, 0
    %683 = vmatpush.msra.mxu0 0.0
    %684 = vmatpush.msra.mxu0 0.0
    %685 = vmatpush.msra.mxu0 0.0
    %686 = vmatpush.msra.mxu0 0.0
    %687 = vmatpush.msra.mxu0 0.0
    %688 = vmatpush.msra.mxu0 0.0
    %689 = vmatpush.msra.mxu0 0.0
    %690 = vmatpush.msra.mxu0 0.0
    %691 = vmatpush.msra.mxu0 0.0
    %692 = vmatpush.msra.mxu0 0.0
    %693 = vmatpush.msra.mxu0 0.0
    %694 = vmatpush.msra.mxu0 0.0
    %695 = vmatpush.msra.mxu0 %v47
    %696 = vmatpush.msra.mxu0 %v46
    %697 = vmatpush.msra.mxu0 %v45
    %698 = vmatpush.msra.mxu0 %v44
    %699 = vmatmul.f32.gmra.mxu0 %v678
    %v700 = vpop.f32.mrf.mxu0
    %v701 = vadd.f32 %v676, %v700
    %702 = vmatmul.f32.gmra.mxu0 %v681
    %v703 = vpop.f32.mrf.mxu0
    %v704 = vadd.f32 %v676, %v703
    %705 = vdwg.mxu0
    %v706 = vmax.f32 %v701, 0.0
    %v707 = vmax.f32 %v704, 0.0
    %v708 = vperm.slane %v65, 0
    %v710 = vsel %vm276, %v706, 0
    %v713 = vsel %vm276, %v707, 0
    %715 = vmatpush.msra.mxu0 0.0
    %716 = vmatpush.msra.mxu0 0.0
    %717 = vmatpush.msra.mxu0 0.0
    %718 = vmatpush.msra.mxu0 0.0
    %719 = vmatpush.msra.mxu0 0.0
    %720 = vmatpush.msra.mxu0 0.0
    %721 = vmatpush.msra.mxu0 0.0
    %722 = vmatpush.msra.mxu0 0.0
    %723 = vmatpush.msra.mxu0 %v55
    %724 = vmatpush.msra.mxu0 %v54
    %725 = vmatpush.msra.mxu0 %v53
    %726 = vmatpush.msra.mxu0 %v52
    %727 = vmatpush.msra.mxu0 %v51
    %728 = vmatpush.msra.mxu0 %v50
    %729 = vmatpush.msra.mxu0 %v49
    %730 = vmatpush.msra.mxu0 %v48
    %731 = vmatmul.f32.gmra.mxu0 %v710
    %v732 = vpop.f32.mrf.mxu0
    %v733 = vadd.f32 %v708, %v732
    %734 = vmatmul.f32.gmra.mxu0 %v713
    %v735 = vpop.f32.mrf.mxu0
    %v736 = vadd.f32 %v708, %v735
    %737 = vdwg.mxu0
    %v738 = vadd.f32 %v733, %v674
    %v739 = vadd.f32 %v736, %v675
    %v740 = vsel %vm126, %v738, 0.0
    %741 = vadd.xlane.f32.xlu0 %v740
    %v742 = vpop.xlane.xlu0 %741
    %v743 = vsel %vm126, %v739, 0.0
    %744 = vadd.xlane.f32.xlu0 %v743
    %v745 = vpop.xlane.xlu0 %744
    %v746 = vmul.f32 %v742, %v631
    %v747 = vmul.f32 %v745, %v631
    %v748 = vsub.f32 %v738, %v746
    %v749 = vsub.f32 %v739, %v747
    %v750 = vmul.f32 %v748, %v748
    %v751 = vmul.f32 %v749, %v749
    %v752 = vsel %vm126, %v750, 0.0
    %753 = vadd.xlane.f32.xlu0 %v752
    %v754 = vpop.xlane.xlu0 %753
    %v755 = vsel %vm126, %v751, 0.0
    %756 = vadd.xlane.f32.xlu0 %v755
    %v757 = vpop.xlane.xlu0 %756
    %v758 = vmul.f32 %v754, %v631
    %v759 = vmul.f32 %v757, %v631
    %v760 = vadd.f32 %v758, 1e-05
    %v761 = vadd.f32 %v759, 1e-05
    %v762 = vrsqrt.pop %v760
    %v763 = vmul.f32 %v762, %v760
    %v764 = vmul.f32 %v763, %v762
    %v765 = vmul.f32 0.5, %v764
    %v766 = vsub.f32 1.5, %v765
    %v767 = vmul.f32 %v762, %v766
    %vm768 = vweird.f32 %v760
    %vm769 = vweird.f32 %v762
    %vm770 = vmor %vm768, %vm769
    %v771 = vsel %vm770, %v762, %v767
    %v772 = vrsqrt.pop %v761
    %v773 = vmul.f32 %v772, %v761
    %v774 = vmul.f32 %v773, %v772
    %v775 = vmul.f32 0.5, %v774
    %v776 = vsub.f32 1.5, %v775
    %v777 = vmul.f32 %v772, %v776
    %vm778 = vweird.f32 %v761
    %vm779 = vweird.f32 %v772
    %vm780 = vmor %vm778, %vm779
    %v781 = vsel %vm780, %v772, %v777
    %v782 = vmul.f32 %v748, %v771
    %v783 = vmul.f32 %v749, %v781
    %v784 = vperm.slane %v62, 0
    %v785 = vmul.f32 %v782, %v784
    %v786 = vmul.f32 %v783, %v784
    %v787 = vperm.slane %v63, 0
    %v788 = vadd.f32 %v785, %v787
    %v789 = vadd.f32 %v786, %v787
    %v791 = vsel %vm584, %v75, 0
    %793 = vmatpush.msra.mxu0 0.0
    %794 = vmatpush.msra.mxu0 0.0
    %795 = vmatpush.msra.mxu0 0.0
    %796 = vmatpush.msra.mxu0 0.0
    %797 = vmatpush.msra.mxu0 0.0
    %798 = vmatpush.msra.mxu0 0.0
    %799 = vmatpush.msra.mxu0 0.0
    %800 = vmatpush.msra.mxu0 0.0
    %801 = vmatpush.msra.mxu0 0.0
    %802 = vmatpush.msra.mxu0 0.0
    %803 = vmatpush.msra.mxu0 0.0
    %804 = vmatpush.msra.mxu0 0.0
    %805 = vmatpush.msra.mxu0 0.0
    %806 = vmatpush.msra.mxu0 0.0
    %807 = vmatpush.msra.mxu0 %v789
    %808 = vmatpush.msra.mxu0 %v788
    %809 = vmatmul.f32.gmra.mxu0 %v791
    %v810 = vpop.f32.mrf.mxu0
    %v811 = vadd.f32 0.0, %v810
    %812 = vdwg.mxu0
    %v813 = vperm.slane %v66, 0
    %v815 = vsel %vm126, %v811, 0
    %817 = vmatpush.msra.mxu0 0.0
    %818 = vmatpush.msra.mxu0 0.0
    %819 = vmatpush.msra.mxu0 0.0
    %820 = vmatpush.msra.mxu0 0.0
    %821 = vmatpush.msra.mxu0 0.0
    %822 = vmatpush.msra.mxu0 0.0
    %823 = vmatpush.msra.mxu0 0.0
    %824 = vmatpush.msra.mxu0 0.0
    %825 = vmatpush.msra.mxu0 0.0
    %826 = vmatpush.msra.mxu0 0.0
    %827 = vmatpush.msra.mxu0 0.0
    %828 = vmatpush.msra.mxu0 0.0
    %829 = vmatpush.msra.mxu0 %v59
    %830 = vmatpush.msra.mxu0 %v58
    %831 = vmatpush.msra.mxu0 %v57
    %832 = vmatpush.msra.mxu0 %v56
    %833 = vmatmul.f32.gmra.mxu0 %v815
    %v834 = vpop.f32.mrf.mxu0
    %v835 = vadd.f32 %v813, %v834
    %836 = vdwg.mxu0
    %837 = vmax.xlane.f32.xlu0 %v835
    %v838 = vpop.xlane.xlu0 %837
    %v839 = vsub.f32 %v835, %v838
    %v840 = vmul.f32 %v839, 1.442695
    %v841 = vpow.pop %v840
    %842 = vadd.xlane.f32.xlu0 %v841
    %v843 = vpop.xlane.xlu0 %842
    %v844 = vlog2.pop %v843
    %v845 = vmul.f32 %v844, 0.6931472
    %v846 = vsub.f32 %v839, %v845
    %847 = vst [vmem:[%s2] sm:$0xff] %v846
    // Predicated region
    $region14: #{transformer_forward.1} parent=1 // pred_check
      _
    $region15: #{transformer_forward.1} parent=1 // pred_check_branch
      %849 = sbr.rel (0) target = $region17
    $region16: #{transformer_forward.1} parent=1 // pred_region
      _
    $region17: #{transformer_forward.1} parent=1 // pred_fallthru
      _
    // Predicated region
    $region18: #{transformer_forward.1} parent=1 // pred_check
      _
    $region19: #{transformer_forward.1} parent=1 // pred_check_branch
      %851 = sbr.rel (0) target = $region21
    $region20: #{transformer_forward.1} parent=1 // pred_region
      _
    $region21: #{transformer_forward.1} parent=1 // pred_fallthru
      _
    %852 = vsyncpa [#allocation3], 1

</llo_original>
